<compile_context>
chip_gen: v6e
topology: v6e:2x2x1
jax: 0.10.0
libtpu: 0.0.40
codegen_flags: <defaults>
</compile_context>

<pallas_src>
import functools
import math

import jax
import jax.numpy as jnp
from jax import lax
from jax.experimental import pallas as pl
from jax.experimental.pallas import tpu as pltpu


# ---------------------------------------------------------------------------
# Kernels
# ---------------------------------------------------------------------------
def _transpose_tile_kernel(x_ref, o_ref):
    # x_ref: (tr, tc) tile; o_ref: (tc, tr) tile (lead dim squeezed away).
    o_ref[...] = x_ref[...].T


def _lead_batched_transpose_kernel(x_ref, o_ref, *, lead_block):
    # x_ref: (lb, tr, tc); o_ref: (lb, tc, tr).  Transpose each lead slice.
    def body(l, carry):
        o_ref[l] = x_ref[l].T
        return carry

    lax.fori_loop(0, lead_block, body, 0, unroll=lead_block <= 8)


# ---------------------------------------------------------------------------
# Tiling heuristics
# ---------------------------------------------------------------------------
def _tile_sizes(R, C, itemsize):
    """Dtype-aware lane-dense tile sizes with a capped VMEM footprint."""
    base = 512 * max(1, 4 // itemsize)        # 512 f32 / 1024 bf16 / 2048 int8
    tr, tc = min(R, base), min(C, base)
    # Cap tile bytes at 2 MiB -> double-buffered in+out footprint <= 8 MiB.
    while tr * tc * itemsize > (2 << 20) and max(tr, tc) > 256:
        if tr >= tc:
            tr = max(256, tr // 2)
        else:
            tc = max(256, tc // 2)
    return tr, tc


def _round_up(v, m):
    return ((v + m - 1) // m) * m


def _batched_transpose(x3):
    """(L, R, C) -> (L, C, R) with a tiled Pallas TPU transpose kernel."""
    L, R, C = x3.shape
    itemsize = jnp.dtype(x3.dtype).itemsize
    tr, tc = _tile_sizes(R, C, itemsize)

    # Fold lead slices into each grid step when a single tile is small.
    slice_bytes = tr * tc * itemsize
    target_step_bytes = 1 << 20
    if slice_bytes >= target_step_bytes:
        lb = 1
    else:
        lb = min(L, max(1, target_step_bytes // slice_bytes), 64)

    gl, gr, gc = pl.cdiv(L, lb), pl.cdiv(R, tr), pl.cdiv(C, tc)

    # v7x: expose >= 2 parallel grid steps for big-enough transposes so both
    # TensorCores engage (harmless on single-core v5e/v6e).
    if gl * gr * gc == 1 and L * R * C * itemsize >= (1 << 20):
        if R >= 256:
            tr = max(128, _round_up(pl.cdiv(R, 2), 128))
        elif C >= 256:
            tc = max(128, _round_up(pl.cdiv(C, 2), 128))
        elif lb > 1:
            lb = max(1, lb // 2)
        gl, gr, gc = pl.cdiv(L, lb), pl.cdiv(R, tr), pl.cdiv(C, tc)

    grid = (gl, gr, gc)
    cost = pl.CostEstimate(flops=0, transcendentals=0,
                           bytes_accessed=2 * L * R * C * itemsize)

    if lb == 1:
        kernel = _transpose_tile_kernel
        in_specs = [pl.BlockSpec((None, tr, tc), lambda l, r, c: (l, r, c))]
        out_specs = pl.BlockSpec((None, tc, tr), lambda l, r, c: (l, c, r))
    else:
        kernel = functools.partial(_lead_batched_transpose_kernel,
                                   lead_block=lb)
        in_specs = [pl.BlockSpec((lb, tr, tc), lambda l, r, c: (l, r, c))]
        out_specs = pl.BlockSpec((lb, tc, tr), lambda l, r, c: (l, c, r))

    return pl.pallas_call(
        kernel,
        out_shape=jax.ShapeDtypeStruct((L, C, R), x3.dtype),
        grid=grid,
        in_specs=in_specs,
        out_specs=out_specs,
        compiler_params=pltpu.CompilerParams(
            dimension_semantics=("parallel", "parallel", "parallel"),
            vmem_limit_bytes=32 * 1024 * 1024),
        cost_estimate=cost,
    )(x3)


# ---------------------------------------------------------------------------
# Permutation dispatch
# ---------------------------------------------------------------------------
def _split_swap_groups(perm):
    """Return (b, m, n) if perm == (0..b-1) + (m..n-1) + (b..m-1), else None."""
    n = len(perm)
    b = 0
    while b < n and perm[b] == b:
        b += 1
    if b == n:                      # identity permutation
        return b, n, n
    m = perm[b]
    if perm[b:] == tuple(range(m, n)) + tuple(range(b, m)):
        return b, m, n
    return None


def permute_pallas(x, perm):
    """Pallas TPU equivalent of torch `x.permute(*perm).contiguous()`."""
    perm = tuple(int(p) for p in perm)
    assert sorted(perm) == list(range(x.ndim)), "invalid permutation"
    out_shape = tuple(x.shape[p] for p in perm)

    groups = _split_swap_groups(perm)
    if groups is None:
        # TODO(synk): general N-D relayout Pallas kernel for permutations that
        # are not "leading dims + swap of two contiguous trailing groups".
        return jnp.transpose(x, perm)

    b, m, n = groups
    if m == n:                      # identity: .contiguous() of contiguous x
        return x

    lead = math.prod(x.shape[:b]) if b else 1
    rows = math.prod(x.shape[b:m])
    cols = math.prod(x.shape[m:n])

    # Degenerate swap: one group has a single element -> pure reshape, skip
    # the kernel and the HBM read/write round trip entirely.
    if rows == 1 or cols == 1:
        return x.reshape(out_shape)

    # Narrow-output / narrow-input guard (per perf review): below 128 lanes the
    # kernel is bound by masked vst.msk stores; XLA's transpose emitter is
    # already near roofline for these, so route them there.
    if min(rows, cols) < 128:
        return jnp.transpose(x, perm)

    # Contiguous collapse / expand: pure layout plumbing outside the kernel.
    x3 = x.reshape(lead, rows, cols)
    out3 = _batched_transpose(x3)                  # (lead, cols, rows)
    return out3.reshape(out_shape)


# ---------------------------------------------------------------------------
# Demo / correctness checks
# ---------------------------------------------------------------------------
if __name__ == "__main__":
    key = jax.random.PRNGKey(0)
    k1, k2, k3, k4 = jax.random.split(key, 4)

    # Case 1: canonical NCHW -> NHWC with a realistic channel count (C=160
    # >= 128) -> lane-dense Pallas batched-transpose path with lead batching.
    x1 = jax.random.normal(k1, (2, 160, 16, 16), dtype=jnp.float32)
    p1 = (0, 2, 3, 1)
    y1 = permute_pallas(x1, p1)
    jax.block_until_ready(y1)
    r1 = jnp.transpose(x1, p1)
    assert y1.shape == r1.shape and bool(jnp.array_equal(y1, r1))

    # Case 2: swap last two axes of a (B, H, S, D) activation -> Pallas path;
    # exercises lead batching and the >=2-parallel-steps split for v7x.
    x2 = jax.random.normal(k2, (2, 4, 256, 128), dtype=jnp.float32)
    p2 = (0, 1, 3, 2)
    y2 = permute_pallas(x2, p2)
    jax.block_until_ready(y2)
    r2 = jnp.transpose(x2, p2)
    assert y2.shape == r2.shape and bool(jnp.array_equal(y2, r2))

    # Case 3: plain 2-D matrix transpose -> Pallas path with a >=1 MiB tile
    # (exercises the single-slice squeezed-lead kernel).
    x3 = jax.random.normal(k3, (512, 640), dtype=jnp.float32)
    p3 = (1, 0)
    y3 = permute_pallas(x3, p3)
    jax.block_until_ready(y3)
    r3 = jnp.transpose(x3, p3)
    assert y3.shape == r3.shape and bool(jnp.array_equal(y3, r3))

    # Case 4: narrow-channel NCHW -> NHWC (C=4): routed to the XLA fallback
    # per the perf review (masked 4/128-lane stores would dominate in Pallas).
    x4 = jax.random.normal(k4, (2, 4, 16, 16), dtype=jnp.float32)
    y4 = permute_pallas(x4, p1)
    jax.block_until_ready(y4)
    r4 = jnp.transpose(x4, p1)
    assert y4.shape == r4.shape and bool(jnp.array_equal(y4, r4))

    # Case 5: identity permutation (contiguous no-op).
    y5 = permute_pallas(x4, (0, 1, 2, 3))
    jax.block_until_ready(y5)
    assert bool(jnp.array_equal(y5, x4))

    print("KERNEL_OK")
</pallas_src>

<mosaic_0001>
module attributes {stable_mosaic.version = 11 : i64} {
  func.func @_lead_batched_transpose_kernel(%arg0: i32, %arg1: i32, %arg2: i32, %arg3: memref<2x160x256xf32, #tpu.memory_space<vmem>>, %arg4: memref<2x256x160xf32, #tpu.memory_space<vmem>>) attributes {dimension_semantics = [#tpu.dimension_semantics<parallel>, #tpu.dimension_semantics<parallel>, #tpu.dimension_semantics<parallel>], iteration_bounds = array<i64: 1, 1, 1>, scalar_prefetch = 0 : i64, scratch_operands = 0 : i64, tpu.core_type = #tpu.core_type<tc>, window_params = [{transform_indices = @transform_0, window_bounds = array<i64: 2, 160, 256>}, {transform_indices = @transform_1, window_bounds = array<i64: 2, 256, 160>}]} {
    %c0_i32 = arith.constant 0 : i32
    %0 = arith.index_cast %c0_i32 : i32 to index
    %c0 = arith.constant 0 : index
    %c0_0 = arith.constant 0 : index
    %1 = vector.load %arg3[%0, %c0, %c0_0] : memref<2x160x256xf32, #tpu.memory_space<vmem>>, vector<1x160x256xf32>
    %2 = vector.shape_cast %1 : vector<1x160x256xf32> to vector<160x256xf32>
    %3 = tpu.transpose %2, [1, 0] : vector<160x256xf32> -> vector<256x160xf32>
    %4 = arith.index_cast %c0_i32 : i32 to index
    %c0_1 = arith.constant 0 : index
    %c0_2 = arith.constant 0 : index
    %5 = vector.load %arg4[%4, %c0_1, %c0_2] : memref<2x256x160xf32, #tpu.memory_space<vmem>>, vector<1x256x160xf32>
    %6 = vector.shape_cast %5 : vector<1x256x160xf32> to vector<256x160xf32>
    %7 = vector.shape_cast %3 : vector<256x160xf32> to vector<1x256x160xf32>
    tpu.vector_store %arg4[%4, %c0_1, %c0_2], %7 {strides = array<i32>} : memref<2x256x160xf32, #tpu.memory_space<vmem>>, vector<1x256x160xf32>,
    %c1_i32 = arith.constant 1 : i32
    %8 = arith.index_cast %c1_i32 : i32 to index
    %c0_3 = arith.constant 0 : index
    %c0_4 = arith.constant 0 : index
    %9 = vector.load %arg3[%8, %c0_3, %c0_4] : memref<2x160x256xf32, #tpu.memory_space<vmem>>, vector<1x160x256xf32>
    %10 = vector.shape_cast %9 : vector<1x160x256xf32> to vector<160x256xf32>
    %11 = tpu.transpose %10, [1, 0] : vector<160x256xf32> -> vector<256x160xf32>
    %12 = arith.index_cast %c1_i32 : i32 to index
    %c0_5 = arith.constant 0 : index
    %c0_6 = arith.constant 0 : index
    %13 = vector.load %arg4[%12, %c0_5, %c0_6] : memref<2x256x160xf32, #tpu.memory_space<vmem>>, vector<1x256x160xf32>
    %14 = vector.shape_cast %13 : vector<1x256x160xf32> to vector<256x160xf32>
    %15 = vector.shape_cast %11 : vector<256x160xf32> to vector<1x256x160xf32>
    tpu.vector_store %arg4[%12, %c0_5, %c0_6], %15 {strides = array<i32>} : memref<2x256x160xf32, #tpu.memory_space<vmem>>, vector<1x256x160xf32>,
    %c2_i32 = arith.constant 2 : i32
    return
  }
  func.func @transform_0(%arg0: i32, %arg1: i32, %arg2: i32) -> (i32, i32, i32) {
    %c0_i32 = arith.constant 0 : i32
    return %arg0, %arg1, %arg2 : i32, i32, i32
  }
  func.func @transform_1(%arg0: i32, %arg1: i32, %arg2: i32) -> (i32, i32, i32) {
    %c0_i32 = arith.constant 0 : i32
    return %arg0, %arg2, %arg1 : i32, i32, i32
  }
}

</mosaic_0001>

<llo_original>
// kernel: tpu_custom_call.1
$region0: #{tpu_custom_call.1}
  #allocation0 [shape = 'u32[]', space=smem, size = 0x4, offset = 0x4, fixed_abs, tag = 'smem constant byte address 0x4 - core index']
  #allocation1 [shape = 'u32[144,128]{1,0:T(1,128)}', space=vmem, size = 0x12000, scoped, tag = 'internal scratch']
  %s0 = inlined_call_operand.hbm [shape: f32[2,160,256], index: 0, kind: input, shape index: {}]
  %s1 = inlined_call_operand.vmem [shape: f32[2,256,160], index: 1, kind: output, shape index: {}]
  %s2 = sld [smem:[#allocation0]]
  $region18: #{tpu_custom_call.1} parent=0
    _
  %s4 = ssub.s32 1, %s2
  %s5 = scalar_select 0, %s4, %s2
  $region1: #{tpu_custom_call.1} parent=0
    #allocation2 [shape = 'u8[327680]{0}', space=vmem, size = 0x50000, scoped, tag = 'input window, operand 0, single buffered']
    #allocation3 [shape = 's32[1]{0}', space=sflag, size = 0x4, scoped, tag = 'scoped memory for tpu_custom_call.1']
    %6 = vsyncpa [#allocation3], 0
    // Predicated region
    $region2: #{tpu_custom_call.1} parent=1 // pred_check
      _
    $region3: #{tpu_custom_call.1} parent=1 // pred_check_branch
      %8 = sbr.rel (0) target = $region5
    $region4: #{tpu_custom_call.1} parent=1 // pred_region
      %s10 = ssub.s32 10240, 10240
      %11 = vsyncadd [#allocation3], %s10
      %s12 = sshll.u32 [#allocation2], 4
      %s13 = int_to_ptr.vmem [resolvable:$true] %s12
      %18 = dma.hbm_to_vmem [thread:$0]  %s0, 10240, %s13, [#allocation3], 256, 256, 16
    $region5: #{tpu_custom_call.1} parent=1 // pred_fallthru
      _
    // Predicated region
    $region6: #{tpu_custom_call.1} parent=1 // pred_check
      _
    $region7: #{tpu_custom_call.1} parent=1 // pred_check_branch
      %20 = sbr.rel (0) target = $region9
    $region8: #{tpu_custom_call.1} parent=1 // pred_region
      %21 = dma.done [#allocation3], 10240
    $region9: #{tpu_custom_call.1} parent=1 // pred_fallthru
      _
    %v22 = vld [vmem:[#allocation2] sm:$0xff]
    %v23 = vld [vmem:[#allocation2 + $0x8] sm:$0xff]
    %v24 = vld [vmem:[#allocation2 + $0x10] sm:$0xff]
    %v25 = vld [vmem:[#allocation2 + $0x18] sm:$0xff]
    %v26 = vld [vmem:[#allocation2 + $0x20] sm:$0xff]
    %v27 = vld [vmem:[#allocation2 + $0x28] sm:$0xff]
    %v28 = vld [vmem:[#allocation2 + $0x30] sm:$0xff]
    %v29 = vld [vmem:[#allocation2 + $0x38] sm:$0xff]
    %v30 = vld [vmem:[#allocation2 + $0x40] sm:$0xff]
    %v31 = vld [vmem:[#allocation2 + $0x48] sm:$0xff]
    %v32 = vld [vmem:[#allocation2 + $0x50] sm:$0xff]
    %v33 = vld [vmem:[#allocation2 + $0x58] sm:$0xff]
    %v34 = vld [vmem:[#allocation2 + $0x60] sm:$0xff]
    %v35 = vld [vmem:[#allocation2 + $0x68] sm:$0xff]
    %v36 = vld [vmem:[#allocation2 + $0x70] sm:$0xff]
    %v37 = vld [vmem:[#allocation2 + $0x78] sm:$0xff]
    %v38 = vld [vmem:[#allocation2 + $0x80] sm:$0xff]
    %v39 = vld [vmem:[#allocation2 + $0x88] sm:$0xff]
    %v40 = vld [vmem:[#allocation2 + $0x90] sm:$0xff]
    %v41 = vld [vmem:[#allocation2 + $0x98] sm:$0xff]
    %v42 = vld [vmem:[#allocation2 + $0xa0] sm:$0xff]
    %v43 = vld [vmem:[#allocation2 + $0xa8] sm:$0xff]
    %v44 = vld [vmem:[#allocation2 + $0xb0] sm:$0xff]
    %v45 = vld [vmem:[#allocation2 + $0xb8] sm:$0xff]
    %v46 = vld [vmem:[#allocation2 + $0xc0] sm:$0xff]
    %v47 = vld [vmem:[#allocation2 + $0xc8] sm:$0xff]
    %v48 = vld [vmem:[#allocation2 + $0xd0] sm:$0xff]
    %v49 = vld [vmem:[#allocation2 + $0xd8] sm:$0xff]
    %v50 = vld [vmem:[#allocation2 + $0xe0] sm:$0xff]
    %v51 = vld [vmem:[#allocation2 + $0xe8] sm:$0xff]
    %v52 = vld [vmem:[#allocation2 + $0xf0] sm:$0xff]
    %v53 = vld [vmem:[#allocation2 + $0xf8] sm:$0xff]
    %v54 = vld [vmem:[#allocation2 + $0x100] sm:$0xff]
    %v55 = vld [vmem:[#allocation2 + $0x108] sm:$0xff]
    %v56 = vld [vmem:[#allocation2 + $0x110] sm:$0xff]
    %v57 = vld [vmem:[#allocation2 + $0x118] sm:$0xff]
    %v58 = vld [vmem:[#allocation2 + $0x120] sm:$0xff]
    %v59 = vld [vmem:[#allocation2 + $0x128] sm:$0xff]
    %v60 = vld [vmem:[#allocation2 + $0x130] sm:$0xff]
    %v61 = vld [vmem:[#allocation2 + $0x138] sm:$0xff]
    %62 = vxpose.xlu0.b32.start [1/16] %v22, 128
    %63 = vxpose.xlu0.b32.cont [2/16] %v24, 128
    %64 = vxpose.xlu0.b32.cont [3/16] %v26, 128
    %65 = vxpose.xlu0.b32.cont [4/16] %v28, 128
    %66 = vxpose.xlu0.b32.cont [5/16] %v30, 128
    %67 = vxpose.xlu0.b32.cont [6/16] %v32, 128
    %68 = vxpose.xlu0.b32.cont [7/16] %v34, 128
    %69 = vxpose.xlu0.b32.cont [8/16] %v36, 128
    %70 = vxpose.xlu0.b32.cont [9/16] %v38, 128
    %71 = vxpose.xlu0.b32.cont [10/16] %v40, 128
    %72 = vxpose.xlu0.b32.cont [11/16] %v42, 128
    %73 = vxpose.xlu0.b32.cont [12/16] %v44, 128
    %74 = vxpose.xlu0.b32.cont [13/16] %v46, 128
    %75 = vxpose.xlu0.b32.cont [14/16] %v48, 128
    %76 = vxpose.xlu0.b32.cont [15/16] %v50, 128
    %77 = vxpose.xlu0.b32.end [16/16] %v52, 128
    %v78 = vpop.trf.xlu0
    %v79 = vpop.trf.xlu0
    %v80 = vpop.trf.xlu0
    %v81 = vpop.trf.xlu0
    %v82 = vpop.trf.xlu0
    %v83 = vpop.trf.xlu0
    %v84 = vpop.trf.xlu0
    %v85 = vpop.trf.xlu0
    %v86 = vpop.trf.xlu0
    %v87 = vpop.trf.xlu0
    %v88 = vpop.trf.xlu0
    %v89 = vpop.trf.xlu0
    %v90 = vpop.trf.xlu0
    %v91 = vpop.trf.xlu0
    %v92 = vpop.trf.xlu0
    %v93 = vpop.trf.xlu0
    %94 = vxpose.xlu0.b32.start [1/16] %v23, 128
    %95 = vxpose.xlu0.b32.cont [2/16] %v25, 128
    %96 = vxpose.xlu0.b32.cont [3/16] %v27, 128
    %97 = vxpose.xlu0.b32.cont [4/16] %v29, 128
    %98 = vxpose.xlu0.b32.cont [5/16] %v31, 128
    %99 = vxpose.xlu0.b32.cont [6/16] %v33, 128
    %100 = vxpose.xlu0.b32.cont [7/16] %v35, 128
    %101 = vxpose.xlu0.b32.cont [8/16] %v37, 128
    %102 = vxpose.xlu0.b32.cont [9/16] %v39, 128
    %103 = vxpose.xlu0.b32.cont [10/16] %v41, 128
    %104 = vxpose.xlu0.b32.cont [11/16] %v43, 128
    %105 = vxpose.xlu0.b32.cont [12/16] %v45, 128
    %106 = vxpose.xlu0.b32.cont [13/16] %v47, 128
    %107 = vxpose.xlu0.b32.cont [14/16] %v49, 128
    %108 = vxpose.xlu0.b32.cont [15/16] %v51, 128
    %109 = vxpose.xlu0.b32.end [16/16] %v53, 128
    %v110 = vpop.trf.xlu0
    %v111 = vpop.trf.xlu0
    %v112 = vpop.trf.xlu0
    %v113 = vpop.trf.xlu0
    %v114 = vpop.trf.xlu0
    %v115 = vpop.trf.xlu0
    %v116 = vpop.trf.xlu0
    %v117 = vpop.trf.xlu0
    %v118 = vpop.trf.xlu0
    %v119 = vpop.trf.xlu0
    %v120 = vpop.trf.xlu0
    %v121 = vpop.trf.xlu0
    %v122 = vpop.trf.xlu0
    %v123 = vpop.trf.xlu0
    %v124 = vpop.trf.xlu0
    %v125 = vpop.trf.xlu0
    %126 = vxpose.xlu0.b32.start [1/16] %v54, 128
    %127 = vxpose.xlu0.b32.cont [2/16] %v56, 128
    %128 = vxpose.xlu0.b32.cont [3/16] %v58, 128
    %129 = vxpose.xlu0.b32.cont [4/16] %v60, 128
    %130 = vxpose.xlu0.b32.cont [5/16] 0.0, 128
    %131 = vxpose.xlu0.b32.cont [6/16] 0.0, 128
    %132 = vxpose.xlu0.b32.cont [7/16] 0.0, 128
    %133 = vxpose.xlu0.b32.cont [8/16] 0.0, 128
    %134 = vxpose.xlu0.b32.cont [9/16] 0.0, 128
    %135 = vxpose.xlu0.b32.cont [10/16] 0.0, 128
    %136 = vxpose.xlu0.b32.cont [11/16] 0.0, 128
    %137 = vxpose.xlu0.b32.cont [12/16] 0.0, 128
    %138 = vxpose.xlu0.b32.cont [13/16] 0.0, 128
    %139 = vxpose.xlu0.b32.cont [14/16] 0.0, 128
    %140 = vxpose.xlu0.b32.cont [15/16] 0.0, 128
    %141 = vxpose.xlu0.b32.end [16/16] 0.0, 128
    %v142 = vpop.trf.xlu0
    %v143 = vpop.trf.xlu0
    %v144 = vpop.trf.xlu0
    %v145 = vpop.trf.xlu0
    %v146 = vpop.trf.xlu0
    %v147 = vpop.trf.xlu0
    %v148 = vpop.trf.xlu0
    %v149 = vpop.trf.xlu0
    %v150 = vpop.trf.xlu0
    %v151 = vpop.trf.xlu0
    %v152 = vpop.trf.xlu0
    %v153 = vpop.trf.xlu0
    %v154 = vpop.trf.xlu0
    %v155 = vpop.trf.xlu0
    %v156 = vpop.trf.xlu0
    %v157 = vpop.trf.xlu0
    %158 = vxpose.xlu0.b32.start [1/16] %v55, 128
    %159 = vxpose.xlu0.b32.cont [2/16] %v57, 128
    %160 = vxpose.xlu0.b32.cont [3/16] %v59, 128
    %161 = vxpose.xlu0.b32.cont [4/16] %v61, 128
    %162 = vxpose.xlu0.b32.cont [5/16] 0.0, 128
    %163 = vxpose.xlu0.b32.cont [6/16] 0.0, 128
    %164 = vxpose.xlu0.b32.cont [7/16] 0.0, 128
    %165 = vxpose.xlu0.b32.cont [8/16] 0.0, 128
    %166 = vxpose.xlu0.b32.cont [9/16] 0.0, 128
    %167 = vxpose.xlu0.b32.cont [10/16] 0.0, 128
    %168 = vxpose.xlu0.b32.cont [11/16] 0.0, 128
    %169 = vxpose.xlu0.b32.cont [12/16] 0.0, 128
    %170 = vxpose.xlu0.b32.cont [13/16] 0.0, 128
    %171 = vxpose.xlu0.b32.cont [14/16] 0.0, 128
    %172 = vxpose.xlu0.b32.cont [15/16] 0.0, 128
    %173 = vxpose.xlu0.b32.end [16/16] 0.0, 128
    %v174 = vpop.trf.xlu0
    %v175 = vpop.trf.xlu0
    %v176 = vpop.trf.xlu0
    %v177 = vpop.trf.xlu0
    %v178 = vpop.trf.xlu0
    %v179 = vpop.trf.xlu0
    %v180 = vpop.trf.xlu0
    %v181 = vpop.trf.xlu0
    %v182 = vpop.trf.xlu0
    %v183 = vpop.trf.xlu0
    %v184 = vpop.trf.xlu0
    %v185 = vpop.trf.xlu0
    %v186 = vpop.trf.xlu0
    %v187 = vpop.trf.xlu0
    %v188 = vpop.trf.xlu0
    %v189 = vpop.trf.xlu0
    %190 = vst [vmem:[%s1] sm:$0xff] %v78
    %vm191 = vcmask 261120
    %192 = vst.msk [vmem:[%s1 + $0x8] sm:$0xff] %vm191, %v142
    %193 = vst [vmem:[%s1 + $0x10] sm:$0xff] %v79
    %194 = vst.msk [vmem:[%s1 + $0x18] sm:$0xff] %vm191, %v143
    %195 = vst [vmem:[%s1 + $0x20] sm:$0xff] %v80
    %196 = vst.msk [vmem:[%s1 + $0x28] sm:$0xff] %vm191, %v144
    %197 = vst [vmem:[%s1 + $0x30] sm:$0xff] %v81
    %198 = vst.msk [vmem:[%s1 + $0x38] sm:$0xff] %vm191, %v145
    %199 = vst [vmem:[%s1 + $0x40] sm:$0xff] %v82
    %200 = vst.msk [vmem:[%s1 + $0x48] sm:$0xff] %vm191, %v146
    %201 = vst [vmem:[%s1 + $0x50] sm:$0xff] %v83
    %202 = vst.msk [vmem:[%s1 + $0x58] sm:$0xff] %vm191, %v147
    %203 = vst [vmem:[%s1 + $0x60] sm:$0xff] %v84
    %204 = vst.msk [vmem:[%s1 + $0x68] sm:$0xff] %vm191, %v148
    %205 = vst [vmem:[%s1 + $0x70] sm:$0xff] %v85
    %206 = vst.msk [vmem:[%s1 + $0x78] sm:$0xff] %vm191, %v149
    %207 = vst [vmem:[%s1 + $0x80] sm:$0xff] %v86
    %208 = vst.msk [vmem:[%s1 + $0x88] sm:$0xff] %vm191, %v150
    %209 = vst [vmem:[%s1 + $0x90] sm:$0xff] %v87
    %210 = vst.msk [vmem:[%s1 + $0x98] sm:$0xff] %vm191, %v151
    %211 = vst [vmem:[%s1 + $0xa0] sm:$0xff] %v88
    %212 = vst.msk [vmem:[%s1 + $0xa8] sm:$0xff] %vm191, %v152
    %213 = vst [vmem:[%s1 + $0xb0] sm:$0xff] %v89
    %214 = vst.msk [vmem:[%s1 + $0xb8] sm:$0xff] %vm191, %v153
    %215 = vst [vmem:[%s1 + $0xc0] sm:$0xff] %v90
    %216 = vst.msk [vmem:[%s1 + $0xc8] sm:$0xff] %vm191, %v154
    %217 = vst [vmem:[%s1 + $0xd0] sm:$0xff] %v91
    %218 = vst.msk [vmem:[%s1 + $0xd8] sm:$0xff] %vm191, %v155
    %219 = vst [vmem:[%s1 + $0xe0] sm:$0xff] %v92
    %220 = vst.msk [vmem:[%s1 + $0xe8] sm:$0xff] %vm191, %v156
    %221 = vst [vmem:[%s1 + $0xf0] sm:$0xff] %v93
    %222 = vst.msk [vmem:[%s1 + $0xf8] sm:$0xff] %vm191, %v157
    %223 = vst [vmem:[%s1 + $0x100] sm:$0xff] %v110
    %224 = vst.msk [vmem:[%s1 + $0x108] sm:$0xff] %vm191, %v174
    %225 = vst [vmem:[%s1 + $0x110] sm:$0xff] %v111
    %226 = vst.msk [vmem:[%s1 + $0x118] sm:$0xff] %vm191, %v175
    %227 = vst [vmem:[%s1 + $0x120] sm:$0xff] %v112
    %228 = vst.msk [vmem:[%s1 + $0x128] sm:$0xff] %vm191, %v176
    %229 = vst [vmem:[%s1 + $0x130] sm:$0xff] %v113
    %230 = vst.msk [vmem:[%s1 + $0x138] sm:$0xff] %vm191, %v177
    %231 = vst [vmem:[%s1 + $0x140] sm:$0xff] %v114
    %232 = vst.msk [vmem:[%s1 + $0x148] sm:$0xff] %vm191, %v178
    %233 = vst [vmem:[%s1 + $0x150] sm:$0xff] %v115
    %234 = vst.msk [vmem:[%s1 + $0x158] sm:$0xff] %vm191, %v179
    %235 = vst [vmem:[%s1 + $0x160] sm:$0xff] %v116
    %236 = vst.msk [vmem:[%s1 + $0x168] sm:$0xff] %vm191, %v180
    %237 = vst [vmem:[%s1 + $0x170] sm:$0xff] %v117
    %238 = vst.msk [vmem:[%s1 + $0x178] sm:$0xff] %vm191, %v181
    %239 = vst [vmem:[%s1 + $0x180] sm:$0xff] %v118
    %240 = vst.msk [vmem:[%s1 + $0x188] sm:$0xff] %vm191, %v182
    %241 = vst [vmem:[%s1 + $0x190] sm:$0xff] %v119
    %242 = vst.msk [vmem:[%s1 + $0x198] sm:$0xff] %vm191, %v183
    %243 = vst [vmem:[%s1 + $0x1a0] sm:$0xff] %v120
    %244 = vst.msk [vmem:[%s1 + $0x1a8] sm:$0xff] %vm191, %v184
    %245 = vst [vmem:[%s1 + $0x1b0] sm:$0xff] %v121
    %246 = vst.msk [vmem:[%s1 + $0x1b8] sm:$0xff] %vm191, %v185
    %247 = vst [vmem:[%s1 + $0x1c0] sm:$0xff] %v122
    %248 = vst.msk [vmem:[%s1 + $0x1c8] sm:$0xff] %vm191, %v186
    %249 = vst [vmem:[%s1 + $0x1d0] sm:$0xff] %v123
    %250 = vst.msk [vmem:[%s1 + $0x1d8] sm:$0xff] %vm191, %v187
    %251 = vst [vmem:[%s1 + $0x1e0] sm:$0xff] %v124
    %252 = vst.msk [vmem:[%s1 + $0x1e8] sm:$0xff] %vm191, %v188
    %253 = vst [vmem:[%s1 + $0x1f0] sm:$0xff] %v125
    %254 = vst.msk [vmem:[%s1 + $0x1f8] sm:$0xff] %vm191, %v189
    %s255 = scalar_lea.vmem [#allocation2], 320
    %v256 = vld [vmem:[%s255] sm:$0xff]
    %v257 = vld [vmem:[%s255 + $0x8] sm:$0xff]
    %v258 = vld [vmem:[%s255 + $0x10] sm:$0xff]
    %v259 = vld [vmem:[%s255 + $0x18] sm:$0xff]
    %v260 = vld [vmem:[%s255 + $0x20] sm:$0xff]
    %v261 = vld [vmem:[%s255 + $0x28] sm:$0xff]
    %v262 = vld [vmem:[%s255 + $0x30] sm:$0xff]
    %v263 = vld [vmem:[%s255 + $0x38] sm:$0xff]
    %v264 = vld [vmem:[%s255 + $0x40] sm:$0xff]
    %v265 = vld [vmem:[%s255 + $0x48] sm:$0xff]
    %v266 = vld [vmem:[%s255 + $0x50] sm:$0xff]
    %v267 = vld [vmem:[%s255 + $0x58] sm:$0xff]
    %v268 = vld [vmem:[%s255 + $0x60] sm:$0xff]
    %v269 = vld [vmem:[%s255 + $0x68] sm:$0xff]
    %v270 = vld [vmem:[%s255 + $0x70] sm:$0xff]
    %v271 = vld [vmem:[%s255 + $0x78] sm:$0xff]
    %v272 = vld [vmem:[%s255 + $0x80] sm:$0xff]
    %v273 = vld [vmem:[%s255 + $0x88] sm:$0xff]
    %v274 = vld [vmem:[%s255 + $0x90] sm:$0xff]
    %v275 = vld [vmem:[%s255 + $0x98] sm:$0xff]
    %v276 = vld [vmem:[%s255 + $0xa0] sm:$0xff]
    %v277 = vld [vmem:[%s255 + $0xa8] sm:$0xff]
    %v278 = vld [vmem:[%s255 + $0xb0] sm:$0xff]
    %v279 = vld [vmem:[%s255 + $0xb8] sm:$0xff]
    %v280 = vld [vmem:[%s255 + $0xc0] sm:$0xff]
    %v281 = vld [vmem:[%s255 + $0xc8] sm:$0xff]
    %v282 = vld [vmem:[%s255 + $0xd0] sm:$0xff]
    %v283 = vld [vmem:[%s255 + $0xd8] sm:$0xff]
    %v284 = vld [vmem:[%s255 + $0xe0] sm:$0xff]
    %v285 = vld [vmem:[%s255 + $0xe8] sm:$0xff]
    %v286 = vld [vmem:[%s255 + $0xf0] sm:$0xff]
    %v287 = vld [vmem:[%s255 + $0xf8] sm:$0xff]
    %v288 = vld [vmem:[%s255 + $0x100] sm:$0xff]
    %v289 = vld [vmem:[%s255 + $0x108] sm:$0xff]
    %v290 = vld [vmem:[%s255 + $0x110] sm:$0xff]
    %v291 = vld [vmem:[%s255 + $0x118] sm:$0xff]
    %v292 = vld [vmem:[%s255 + $0x120] sm:$0xff]
    %v293 = vld [vmem:[%s255 + $0x128] sm:$0xff]
    %v294 = vld [vmem:[%s255 + $0x130] sm:$0xff]
    %v295 = vld [vmem:[%s255 + $0x138] sm:$0xff]
    %296 = vxpose.xlu0.b32.start [1/16] %v256, 128
    %297 = vxpose.xlu0.b32.cont [2/16] %v258, 128
    %298 = vxpose.xlu0.b32.cont [3/16] %v260, 128
    %299 = vxpose.xlu0.b32.cont [4/16] %v262, 128
    %300 = vxpose.xlu0.b32.cont [5/16] %v264, 128
    %301 = vxpose.xlu0.b32.cont [6/16] %v266, 128
    %302 = vxpose.xlu0.b32.cont [7/16] %v268, 128
    %303 = vxpose.xlu0.b32.cont [8/16] %v270, 128
    %304 = vxpose.xlu0.b32.cont [9/16] %v272, 128
    %305 = vxpose.xlu0.b32.cont [10/16] %v274, 128
    %306 = vxpose.xlu0.b32.cont [11/16] %v276, 128
    %307 = vxpose.xlu0.b32.cont [12/16] %v278, 128
    %308 = vxpose.xlu0.b32.cont [13/16] %v280, 128
    %309 = vxpose.xlu0.b32.cont [14/16] %v282, 128
    %310 = vxpose.xlu0.b32.cont [15/16] %v284, 128
    %311 = vxpose.xlu0.b32.end [16/16] %v286, 128
    %v312 = vpop.trf.xlu0
    %v313 = vpop.trf.xlu0
    %v314 = vpop.trf.xlu0
    %v315 = vpop.trf.xlu0
    %v316 = vpop.trf.xlu0
    %v317 = vpop.trf.xlu0
    %v318 = vpop.trf.xlu0
    %v319 = vpop.trf.xlu0
    %v320 = vpop.trf.xlu0
    %v321 = vpop.trf.xlu0
    %v322 = vpop.trf.xlu0
    %v323 = vpop.trf.xlu0
    %v324 = vpop.trf.xlu0
    %v325 = vpop.trf.xlu0
    %v326 = vpop.trf.xlu0
    %v327 = vpop.trf.xlu0
    %328 = vxpose.xlu0.b32.start [1/16] %v257, 128
    %329 = vxpose.xlu0.b32.cont [2/16] %v259, 128
    %330 = vxpose.xlu0.b32.cont [3/16] %v261, 128
    %331 = vxpose.xlu0.b32.cont [4/16] %v263, 128
    %332 = vxpose.xlu0.b32.cont [5/16] %v265, 128
    %333 = vxpose.xlu0.b32.cont [6/16] %v267, 128
    %334 = vxpose.xlu0.b32.cont [7/16] %v269, 128
    %335 = vxpose.xlu0.b32.cont [8/16] %v271, 128
    %336 = vxpose.xlu0.b32.cont [9/16] %v273, 128
    %337 = vxpose.xlu0.b32.cont [10/16] %v275, 128
    %338 = vxpose.xlu0.b32.cont [11/16] %v277, 128
    %339 = vxpose.xlu0.b32.cont [12/16] %v279, 128
    %340 = vxpose.xlu0.b32.cont [13/16] %v281, 128
    %341 = vxpose.xlu0.b32.cont [14/16] %v283, 128
    %342 = vxpose.xlu0.b32.cont [15/16] %v285, 128
    %343 = vxpose.xlu0.b32.end [16/16] %v287, 128
    %v344 = vpop.trf.xlu0
    %v345 = vpop.trf.xlu0
    %v346 = vpop.trf.xlu0
    %v347 = vpop.trf.xlu0
    %v348 = vpop.trf.xlu0
    %v349 = vpop.trf.xlu0
    %v350 = vpop.trf.xlu0
    %v351 = vpop.trf.xlu0
    %v352 = vpop.trf.xlu0
    %v353 = vpop.trf.xlu0
    %v354 = vpop.trf.xlu0
    %v355 = vpop.trf.xlu0
    %v356 = vpop.trf.xlu0
    %v357 = vpop.trf.xlu0
    %v358 = vpop.trf.xlu0
    %v359 = vpop.trf.xlu0
    %360 = vxpose.xlu0.b32.start [1/16] %v288, 128
    %361 = vxpose.xlu0.b32.cont [2/16] %v290, 128
    %362 = vxpose.xlu0.b32.cont [3/16] %v292, 128
    %363 = vxpose.xlu0.b32.cont [4/16] %v294, 128
    %364 = vxpose.xlu0.b32.cont [5/16] 0.0, 128
    %365 = vxpose.xlu0.b32.cont [6/16] 0.0, 128
    %366 = vxpose.xlu0.b32.cont [7/16] 0.0, 128
    %367 = vxpose.xlu0.b32.cont [8/16] 0.0, 128
    %368 = vxpose.xlu0.b32.cont [9/16] 0.0, 128
    %369 = vxpose.xlu0.b32.cont [10/16] 0.0, 128
    %370 = vxpose.xlu0.b32.cont [11/16] 0.0, 128
    %371 = vxpose.xlu0.b32.cont [12/16] 0.0, 128
    %372 = vxpose.xlu0.b32.cont [13/16] 0.0, 128
    %373 = vxpose.xlu0.b32.cont [14/16] 0.0, 128
    %374 = vxpose.xlu0.b32.cont [15/16] 0.0, 128
    %375 = vxpose.xlu0.b32.end [16/16] 0.0, 128
    %v376 = vpop.trf.xlu0
    %v377 = vpop.trf.xlu0
    %v378 = vpop.trf.xlu0
    %v379 = vpop.trf.xlu0
    %v380 = vpop.trf.xlu0
    %v381 = vpop.trf.xlu0
    %v382 = vpop.trf.xlu0
    %v383 = vpop.trf.xlu0
    %v384 = vpop.trf.xlu0
    %v385 = vpop.trf.xlu0
    %v386 = vpop.trf.xlu0
    %v387 = vpop.trf.xlu0
    %v388 = vpop.trf.xlu0
    %v389 = vpop.trf.xlu0
    %v390 = vpop.trf.xlu0
    %v391 = vpop.trf.xlu0
    %392 = vxpose.xlu0.b32.start [1/16] %v289, 128
    %393 = vxpose.xlu0.b32.cont [2/16] %v291, 128
    %394 = vxpose.xlu0.b32.cont [3/16] %v293, 128
    %395 = vxpose.xlu0.b32.cont [4/16] %v295, 128
    %396 = vxpose.xlu0.b32.cont [5/16] 0.0, 128
    %397 = vxpose.xlu0.b32.cont [6/16] 0.0, 128
    %398 = vxpose.xlu0.b32.cont [7/16] 0.0, 128
    %399 = vxpose.xlu0.b32.cont [8/16] 0.0, 128
    %400 = vxpose.xlu0.b32.cont [9/16] 0.0, 128
    %401 = vxpose.xlu0.b32.cont [10/16] 0.0, 128
    %402 = vxpose.xlu0.b32.cont [11/16] 0.0, 128
    %403 = vxpose.xlu0.b32.cont [12/16] 0.0, 128
    %404 = vxpose.xlu0.b32.cont [13/16] 0.0, 128
    %405 = vxpose.xlu0.b32.cont [14/16] 0.0, 128
    %406 = vxpose.xlu0.b32.cont [15/16] 0.0, 128
    %407 = vxpose.xlu0.b32.end [16/16] 0.0, 128
    %v408 = vpop.trf.xlu0
    %v409 = vpop.trf.xlu0
    %v410 = vpop.trf.xlu0
    %v411 = vpop.trf.xlu0
    %v412 = vpop.trf.xlu0
    %v413 = vpop.trf.xlu0
    %v414 = vpop.trf.xlu0
    %v415 = vpop.trf.xlu0
    %v416 = vpop.trf.xlu0
    %v417 = vpop.trf.xlu0
    %v418 = vpop.trf.xlu0
    %v419 = vpop.trf.xlu0
    %v420 = vpop.trf.xlu0
    %v421 = vpop.trf.xlu0
    %v422 = vpop.trf.xlu0
    %v423 = vpop.trf.xlu0
    %s424 = scalar_lea.vmem %s1, 512
    %425 = vst [vmem:[%s424] sm:$0xff] %v312
    %426 = vst.msk [vmem:[%s424 + $0x8] sm:$0xff] %vm191, %v376
    %427 = vst [vmem:[%s424 + $0x10] sm:$0xff] %v313
    %428 = vst.msk [vmem:[%s424 + $0x18] sm:$0xff] %vm191, %v377
    %429 = vst [vmem:[%s424 + $0x20] sm:$0xff] %v314
    %430 = vst.msk [vmem:[%s424 + $0x28] sm:$0xff] %vm191, %v378
    %431 = vst [vmem:[%s424 + $0x30] sm:$0xff] %v315
    %432 = vst.msk [vmem:[%s424 + $0x38] sm:$0xff] %vm191, %v379
    %433 = vst [vmem:[%s424 + $0x40] sm:$0xff] %v316
    %434 = vst.msk [vmem:[%s424 + $0x48] sm:$0xff] %vm191, %v380
    %435 = vst [vmem:[%s424 + $0x50] sm:$0xff] %v317
    %436 = vst.msk [vmem:[%s424 + $0x58] sm:$0xff] %vm191, %v381
    %437 = vst [vmem:[%s424 + $0x60] sm:$0xff] %v318
    %438 = vst.msk [vmem:[%s424 + $0x68] sm:$0xff] %vm191, %v382
    %439 = vst [vmem:[%s424 + $0x70] sm:$0xff] %v319
    %440 = vst.msk [vmem:[%s424 + $0x78] sm:$0xff] %vm191, %v383
    %441 = vst [vmem:[%s424 + $0x80] sm:$0xff] %v320
    %442 = vst.msk [vmem:[%s424 + $0x88] sm:$0xff] %vm191, %v384
    %443 = vst [vmem:[%s424 + $0x90] sm:$0xff] %v321
    %444 = vst.msk [vmem:[%s424 + $0x98] sm:$0xff] %vm191, %v385
    %445 = vst [vmem:[%s424 + $0xa0] sm:$0xff] %v322
    %446 = vst.msk [vmem:[%s424 + $0xa8] sm:$0xff] %vm191, %v386
    %447 = vst [vmem:[%s424 + $0xb0] sm:$0xff] %v323
    %448 = vst.msk [vmem:[%s424 + $0xb8] sm:$0xff] %vm191, %v387
    %449 = vst [vmem:[%s424 + $0xc0] sm:$0xff] %v324
    %450 = vst.msk [vmem:[%s424 + $0xc8] sm:$0xff] %vm191, %v388
    %451 = vst [vmem:[%s424 + $0xd0] sm:$0xff] %v325
    %452 = vst.msk [vmem:[%s424 + $0xd8] sm:$0xff] %vm191, %v389
    %453 = vst [vmem:[%s424 + $0xe0] sm:$0xff] %v326
    %454 = vst.msk [vmem:[%s424 + $0xe8] sm:$0xff] %vm191, %v390
    %455 = vst [vmem:[%s424 + $0xf0] sm:$0xff] %v327
    %456 = vst.msk [vmem:[%s424 + $0xf8] sm:$0xff] %vm191, %v391
    %457 = vst [vmem:[%s424 + $0x100] sm:$0xff] %v344
    %458 = vst.msk [vmem:[%s424 + $0x108] sm:$0xff] %vm191, %v408
    %459 = vst [vmem:[%s424 + $0x110] sm:$0xff] %v345
    %460 = vst.msk [vmem:[%s424 + $0x118] sm:$0xff] %vm191, %v409
    %461 = vst [vmem:[%s424 + $0x120] sm:$0xff] %v346
    %462 = vst.msk [vmem:[%s424 + $0x128] sm:$0xff] %vm191, %v410
    %463 = vst [vmem:[%s424 + $0x130] sm:$0xff] %v347
    %464 = vst.msk [vmem:[%s424 + $0x138] sm:$0xff] %vm191, %v411
    %465 = vst [vmem:[%s424 + $0x140] sm:$0xff] %v348
    %466 = vst.msk [vmem:[%s424 + $0x148] sm:$0xff] %vm191, %v412
    %467 = vst [vmem:[%s424 + $0x150] sm:$0xff] %v349
    %468 = vst.msk [vmem:[%s424 + $0x158] sm:$0xff] %vm191, %v413
    %469 = vst [vmem:[%s424 + $0x160] sm:$0xff] %v350
    %470 = vst.msk [vmem:[%s424 + $0x168] sm:$0xff] %vm191, %v414
    %471 = vst [vmem:[%s424 + $0x170] sm:$0xff] %v351
    %472 = vst.msk [vmem:[%s424 + $0x178] sm:$0xff] %vm191, %v415
    %473 = vst [vmem:[%s424 + $0x180] sm:$0xff] %v352
    %474 = vst.msk [vmem:[%s424 + $0x188] sm:$0xff] %vm191, %v416
    %475 = vst [vmem:[%s424 + $0x190] sm:$0xff] %v353
    %476 = vst.msk [vmem:[%s424 + $0x198] sm:$0xff] %vm191, %v417
    %477 = vst [vmem:[%s424 + $0x1a0] sm:$0xff] %v354
    %478 = vst.msk [vmem:[%s424 + $0x1a8] sm:$0xff] %vm191, %v418
    %479 = vst [vmem:[%s424 + $0x1b0] sm:$0xff] %v355
    %480 = vst.msk [vmem:[%s424 + $0x1b8] sm:$0xff] %vm191, %v419
    %481 = vst [vmem:[%s424 + $0x1c0] sm:$0xff] %v356
    %482 = vst.msk [vmem:[%s424 + $0x1c8] sm:$0xff] %vm191, %v420
    %483 = vst [vmem:[%s424 + $0x1d0] sm:$0xff] %v357
    %484 = vst.msk [vmem:[%s424 + $0x1d8] sm:$0xff] %vm191, %v421
    %485 = vst [vmem:[%s424 + $0x1e0] sm:$0xff] %v358
    %486 = vst.msk [vmem:[%s424 + $0x1e8] sm:$0xff] %vm191, %v422
    %487 = vst [vmem:[%s424 + $0x1f0] sm:$0xff] %v359
    %488 = vst.msk [vmem:[%s424 + $0x1f8] sm:$0xff] %vm191, %v423
    // Predicated region
    $region10: #{tpu_custom_call.1} parent=1 // pred_check
      _
    $region11: #{tpu_custom_call.1} parent=1 // pred_check_branch
      %490 = sbr.rel (0) target = $region13
    $region12: #{tpu_custom_call.1} parent=1 // pred_region
      _
    $region13: #{tpu_custom_call.1} parent=1 // pred_fallthru
      _
    // Predicated region
    $region14: #{tpu_custom_call.1} parent=1 // pred_check
      _
    $region15: #{tpu_custom_call.1} parent=1 // pred_check_branch
      %492 = sbr.rel (0) target = $region17
    $region16: #{tpu_custom_call.1} parent=1 // pred_region
      _
    $region17: #{tpu_custom_call.1} parent=1 // pred_fallthru
      _
    %493 = vsyncpa [#allocation3], 1

</llo_original>
